<compile_context>
chip_gen: v7x
topology: tpu7x:2x2x1
jax: 0.10.0
libtpu: 0.0.40
codegen_flags: <defaults>
</compile_context>

<pallas_src>
import functools
import math

import jax
import jax.numpy as jnp
from jax.experimental import pallas as pl
from jax.experimental.pallas import tpu as pltpu


def _patch_embed_kernel(p_ref, w_ref, b_ref, o_ref):
    # p_ref: (tm, K)  bf16 patches tile
    # w_ref: (K, E)   bf16 flattened/transposed conv weight
    # b_ref: (1, E)   f32 bias
    # o_ref: (tm, E)  f32 output tile
    acc = jnp.dot(p_ref[...], w_ref[...], preferred_element_type=jnp.float32)
    o_ref[...] = (acc + b_ref[...]).astype(o_ref.dtype)


def _pick_tile_m(M, *, max_tile=1024, min_tile=256):
    """Choose (tile_m, padded_M) for the row (M) dimension."""
    if M <= max_tile:
        # Small/medium problems: a single block, or two decent blocks so both
        # TensorCores on v7x get work.
        if M >= 2 * min_tile and M % 16 == 0:
            return M // 2, M
        return M, M
    # Largest sublane-aligned (multiple of 8) divisor of M in
    # [min_tile, max_tile]: big tiles, zero wasted rows.
    for d in range(max_tile, min_tile - 1, -8):
        if M % d == 0:
            return d, M
    # No aligned divisor big enough: pad M up (waste < one tile of rows).
    tile = 512
    return tile, pl.cdiv(M, tile) * tile


def _proj_matmul(patches, w, b, *, tile_m, out_dtype):
    M, K = patches.shape
    _, N = w.shape
    assert M % tile_m == 0
    grid = (M // tile_m,)

    in_bytes = patches.dtype.itemsize
    out_bytes = jnp.dtype(out_dtype).itemsize

    # VMEM footprint estimate (lane dim pads to 128), double-buffered.
    kp = -(-K // 128) * 128
    np_ = -(-N // 128) * 128
    tile_bytes = tile_m * kp * in_bytes + tile_m * np_ * out_bytes
    fixed_bytes = kp * np_ * in_bytes + np_ * 4
    vmem_limit = min(64 * 1024 * 1024,
                     max(16 * 1024 * 1024,
                         2 * (tile_bytes + fixed_bytes) + 4 * 1024 * 1024))

    cost = pl.CostEstimate(
        flops=2 * M * K * N,
        transcendentals=0,
        bytes_accessed=(M * K + K * N) * in_bytes + M * N * out_bytes + N * 4,
    )

    return pl.pallas_call(
        _patch_embed_kernel,
        out_shape=jax.ShapeDtypeStruct((M, N), out_dtype),
        grid=grid,
        in_specs=[
            pl.BlockSpec((tile_m, K), lambda i: (i, 0)),
            pl.BlockSpec((K, N), lambda i: (0, 0)),
            pl.BlockSpec((1, N), lambda i: (0, 0)),
        ],
        out_specs=pl.BlockSpec((tile_m, N), lambda i: (i, 0)),
        compiler_params=pltpu.CompilerParams(
            dimension_semantics=("parallel",),
            vmem_limit_bytes=int(vmem_limit),
            # Allow XLA to fuse the patch-extraction reshape/transpose (and
            # the bf16 cast / pad) into the kernel's input loads rather than
            # doing a separate full HBM round trip.
            allow_input_fusion=[True, False, False],
        ),
        cost_estimate=cost,
    )(patches, w, b)


def patch_embed_forward(x, conv_w, conv_b, *, patch_size,
                        compute_dtype=jnp.bfloat16, out_dtype=jnp.float32):
    """x: (B, C, H, W). conv_w: (E, C, ph, pw). conv_b: (E,).

    Returns (B, Ho, Wo, E), matching PyTorch's proj(x).permute(0, 2, 3, 1).
    """
    B, C, H, W = x.shape
    ph, pw = patch_size
    assert H % ph == 0 and W % pw == 0, "image size must match model"
    Ho, Wo = H // ph, W // pw
    E = conv_w.shape[0]
    K = C * ph * pw
    M = B * Ho * Wo

    # Cast the streamed activation *before* extraction so any non-fused HBM
    # pass moves half the bytes; MXU accumulation stays f32 in the kernel.
    xc = x.astype(compute_dtype)

    # Non-overlapping patches, K ordered (C, kh, kw) to match OIHW weights.
    # (B, C, Ho, ph, Wo, pw) -> (B, Ho, Wo, C, ph, pw) -> (M, K)
    patches = xc.reshape(B, C, Ho, ph, Wo, pw)
    patches = patches.transpose(0, 2, 4, 1, 3, 5)
    patches = patches.reshape(M, K)

    w = conv_w.reshape(E, K).T.astype(compute_dtype)   # (K, E)
    b = conv_b.reshape(1, E).astype(jnp.float32)       # exact f32 bias add

    tile_m, m_pad = _pick_tile_m(M)
    if m_pad != M:
        patches = jnp.pad(patches, ((0, m_pad - M), (0, 0)))

    out = _proj_matmul(patches, w, b, tile_m=tile_m, out_dtype=out_dtype)
    if m_pad != M:
        out = out[:M]
    return out.reshape(B, Ho, Wo, E)


def _reference_forward(x, conv_w, conv_b, *, patch_size):
    """Plain-JAX reference (Conv2d stride==kernel + permute)."""
    y = jax.lax.conv_general_dilated(
        x, conv_w,
        window_strides=patch_size,
        padding="VALID",
        dimension_numbers=("NCHW", "OIHW", "NCHW"),
        precision=jax.lax.Precision.HIGHEST,
    )
    y = y + conv_b[None, :, None, None]
    return jnp.transpose(y, (0, 2, 3, 1))


if __name__ == "__main__":
    # Small shapes consistent with the module (in_chans=3, patch_size=4,
    # embed_dim scaled down); spatial size chosen so the M tiling is actually
    # exercised (M = 512 -> 2 tiles of 256 rows).
    B, C, H, W = 2, 3, 64, 64
    patch = (4, 4)
    E = 32

    key = jax.random.PRNGKey(0)
    kx, kw, kb = jax.random.split(key, 3)

    x = jax.random.normal(kx, (B, C, H, W), dtype=jnp.float32)

    # Deterministic init mimicking Conv2d's uniform(-bound, bound).
    fan_in = C * patch[0] * patch[1]
    bound = 1.0 / math.sqrt(fan_in)
    conv_w = jax.random.uniform(kw, (E, C, patch[0], patch[1]),
                                minval=-bound, maxval=bound, dtype=jnp.float32)
    conv_b = jax.random.uniform(kb, (E,), minval=-bound, maxval=bound,
                                dtype=jnp.float32)

    fwd = jax.jit(functools.partial(patch_embed_forward, patch_size=patch))
    out = jax.block_until_ready(fwd(x, conv_w, conv_b))

    # Reference computed on the same bf16-rounded operands (the kernel streams
    # bf16 but accumulates in f32), so the comparison is tight.
    x_r = x.astype(jnp.bfloat16).astype(jnp.float32)
    w_r = conv_w.astype(jnp.bfloat16).astype(jnp.float32)
    ref = _reference_forward(x_r, w_r, conv_b, patch_size=patch)

    assert out.shape == (B, H // patch[0], W // patch[1], E), out.shape
    assert out.dtype == jnp.float32, out.dtype
    max_err = float(jnp.max(jnp.abs(out - ref)))
    assert max_err < 1e-4, max_err

    # TODO(synk): norm_layer defaults to None in the module, so no norm here.
    print("KERNEL_OK")
</pallas_src>

<mosaic_0001>
module attributes {stable_mosaic.version = 11 : i64} {
  func.func @_patch_embed_kernel(%arg0: i32, %arg1: memref<256x48xbf16, #tpu.memory_space<vmem>>, %arg2: memref<48x32xbf16, #tpu.memory_space<vmem>>, %arg3: memref<1x32xf32, #tpu.memory_space<vmem>>, %arg4: memref<256x32xf32, #tpu.memory_space<vmem>>) attributes {dimension_semantics = [#tpu.dimension_semantics<parallel>], iteration_bounds = array<i64: 2>, scalar_prefetch = 0 : i64, scratch_operands = 0 : i64, tpu.core_type = #tpu.core_type<tc>, window_params = [{transform_indices = @transform_0, window_bounds = array<i64: 256, 48>}, {pipeline_mode = #tpu.pipeline_mode<synchronous>, transform_indices = @transform_1, window_bounds = array<i64: 48, 32>}, {pipeline_mode = #tpu.pipeline_mode<synchronous>, transform_indices = @transform_2, window_bounds = array<i64: 1, 32>}, {transform_indices = @transform_3, window_bounds = array<i64: 256, 32>}]} {
    %c0 = arith.constant 0 : index
    %c0_0 = arith.constant 0 : index
    %0 = vector.load %arg1[%c0, %c0_0] : memref<256x48xbf16, #tpu.memory_space<vmem>>, vector<256x48xbf16>
    %c0_1 = arith.constant 0 : index
    %c0_2 = arith.constant 0 : index
    %1 = vector.load %arg2[%c0_1, %c0_2] : memref<48x32xbf16, #tpu.memory_space<vmem>>, vector<48x32xbf16>
    %cst = arith.constant dense<0.000000e+00> : vector<256x32xf32>
    %2 = tpu.matmul %0, %1, %cst {dimension_numbers = #tpu.dot_dimension_numbers<[1], [0], [0], [1], [0, 0, 1, 1], [], []>} : vector<256x48xbf16>, vector<48x32xbf16>, vector<256x32xf32> -> vector<256x32xf32>
    %c0_3 = arith.constant 0 : index
    %c0_4 = arith.constant 0 : index
    %3 = vector.load %arg3[%c0_3, %c0_4] : memref<1x32xf32, #tpu.memory_space<vmem>>, vector<1x32xf32>
    %4 = vector.broadcast %3 : vector<1x32xf32> to vector<256x32xf32>
    %5 = arith.addf %2, %4 : vector<256x32xf32>
    %c0_5 = arith.constant 0 : index
    %c0_6 = arith.constant 0 : index
    %6 = vector.load %arg4[%c0_5, %c0_6] : memref<256x32xf32, #tpu.memory_space<vmem>>, vector<256x32xf32>
    tpu.vector_store %arg4[%c0_5, %c0_6], %5 {strides = array<i32>} : memref<256x32xf32, #tpu.memory_space<vmem>>, vector<256x32xf32>,
    return
  }
  func.func @transform_0(%arg0: i32) -> (i32, i32) {
    %c0_i32 = arith.constant 0 : i32
    %c0_i32_0 = arith.constant 0 : i32
    return %arg0, %c0_i32 : i32, i32
  }
  func.func @transform_1(%arg0: i32) -> (i32, i32) {
    %c0_i32 = arith.constant 0 : i32
    %c0_i32_0 = arith.constant 0 : i32
    %c0_i32_1 = arith.constant 0 : i32
    return %c0_i32, %c0_i32_0 : i32, i32
  }
  func.func @transform_2(%arg0: i32) -> (i32, i32) {
    %c0_i32 = arith.constant 0 : i32
    %c0_i32_0 = arith.constant 0 : i32
    %c0_i32_1 = arith.constant 0 : i32
    return %c0_i32, %c0_i32_0 : i32, i32
  }
  func.func @transform_3(%arg0: i32) -> (i32, i32) {
    %c0_i32 = arith.constant 0 : i32
    %c0_i32_0 = arith.constant 0 : i32
    return %arg0, %c0_i32 : i32, i32
  }
}

</mosaic_0001>

<llo_original>
// kernel: patch_embed_forward.1
$region0: #{patch_embed_forward.1}
  #allocation0 [shape = 'u32[]', space=smem, size = 0x4, offset = 0x4, fixed_abs, tag = 'smem constant byte address 0x4 - core index']
  #allocation1 [shape = 'u32[144,128]{1,0:T(1,128)}', space=vmem, size = 0x12000, scoped, tag = 'internal scratch']
  %s0 = inlined_call_operand.vmem [shape: bf16[512,48], index: 0, kind: input, shape index: {}]
  %s1 = inlined_call_operand.vmem [shape: bf16[48,32], index: 1, kind: input, shape index: {}]
  %s2 = inlined_call_operand.vmem [shape: f32[1,32], index: 2, kind: input, shape index: {}]
  %s3 = inlined_call_operand.hbm [shape: f32[512,32], index: 3, kind: output, shape index: {}]
  %s4 = sld [smem:[#allocation0]]
  $region45: #{patch_embed_forward.1} parent=0
    _
  %s6 = ssub.s32 1, %s4
  %s7 = scalar_select 0, %s6, %s4
  $region1: #{patch_embed_forward.1} parent=0
    #allocation2 [shape = 'u8[262144]{0}', space=vmem, size = 0x40000, scoped, tag = 'output window, operand 0']
    #allocation3 [shape = 's32[2]{0}', space=sflag, size = 0x8, scoped, tag = 'scoped memory for patch_embed_forward.1']
    %8 = vsyncpa [#allocation3], 0
    %s9 = scalar_lea.sflag [#allocation3], 1
    %10 = vsyncpa %s9, 0
    loop: start=0, step=1, limit=4
    $region2: #{patch_embed_forward.1} parent=1 // loop_pre_header
      _
    $region3: #{patch_embed_forward.1} parent=1 // loop_header
      %s12 = sphi 0, %s16
      %p13 = scmp.ge.s32.totalorder %s12, 4
      %s22 = sphi 0, %s24
      %s25 = sphi 0, %s22
      %s26 = sphi 0, %s25
      %s42 = sphi 0, %s26
      %s46 = sphi 0, %s46
      %s48 = sphi 0, %s46
      %s49 = sphi 0, %s48
      %s63 = sphi 0, %s49
      %s67 = sphi 0, %s67
      %s69 = sphi 0, %s67
      %s70 = sphi 0, %s69
      %s84 = sphi 0, %s70
      %s90 = sphi 0, %s92
      %s93 = sphi 0, %s90
      %s94 = sphi 0, %s93
      %s110 = sphi 0, %s94
    $region4: #{patch_embed_forward.1} parent=1 // loop_header_branch
      %15 = sbr.rel (%p13) target = $region8
    $region5: #{patch_embed_forward.1} parent=1 // loop_body
      %s17 = ssub.s32 %s12, 1
      %s18 = ssub.s32 %s12, 2
      %s19 = sadd.s32 %s12, 1
      %s20 = ssub.s32 %s12, %s19
      %p21 = scmp.eq.s32.totalorder %s20, 0
      %s23 = sadd.s32 %s22, 1
      %s24 = scalar_select %p21, %s22, %s23
      %p27 = pneg %p21
      %p28 = scmp.eq.s32.totalorder %s12, 1
      %p29 = por %p27, %p28
      %p30 = scmp.ne.s32.totalorder %s22, %s25
      %p31 = scmp.eq.s32.totalorder %s12, 0
      %p32 = por %p30, %p31
      %p33 = scmp.ne.s32.totalorder %s22, %s25
      %p34 = scmp.eq.s32.totalorder %s17, 1
      %p35 = por %p33, %p34
      %p36 = scmp.ne.s32.totalorder %s25, %s26
      %p37 = scmp.eq.s32.totalorder %s17, 0
      %p38 = por %p36, %p37
      %p39 = scmp.ne.s32.totalorder %s25, %s26
      %p40 = scmp.eq.s32.totalorder %s18, 1
      %p41 = por %p39, %p40
      %p43 = scmp.ne.s32.totalorder %s26, %s42
      %p44 = scmp.eq.s32.totalorder %s18, 0
      %p45 = por %p43, %p44
      %s47 = sadd.s32 %s46, 1
      %p50 = scmp.eq.s32.totalorder %s12, 1
      %p51 = scmp.ne.s32.totalorder %s46, %s48
      %p52 = scmp.eq.s32.totalorder %s12, 0
      %p53 = por %p51, %p52
      %p54 = scmp.ne.s32.totalorder %s46, %s48
      %p55 = scmp.eq.s32.totalorder %s17, 1
      %p56 = por %p54, %p55
      %p57 = scmp.ne.s32.totalorder %s48, %s49
      %p58 = scmp.eq.s32.totalorder %s17, 0
      %p59 = por %p57, %p58
      %p60 = scmp.ne.s32.totalorder %s48, %s49
      %p61 = scmp.eq.s32.totalorder %s18, 1
      %p62 = por %p60, %p61
      %p64 = scmp.ne.s32.totalorder %s49, %s63
      %p65 = scmp.eq.s32.totalorder %s18, 0
      %p66 = por %p64, %p65
      %s68 = sadd.s32 %s67, 1
      %p71 = scmp.eq.s32.totalorder %s12, 1
      %p72 = scmp.ne.s32.totalorder %s67, %s69
      %p73 = scmp.eq.s32.totalorder %s12, 0
      %p74 = por %p72, %p73
      %p75 = scmp.ne.s32.totalorder %s67, %s69
      %p76 = scmp.eq.s32.totalorder %s17, 1
      %p77 = por %p75, %p76
      %p78 = scmp.ne.s32.totalorder %s69, %s70
      %p79 = scmp.eq.s32.totalorder %s17, 0
      %p80 = por %p78, %p79
      %p81 = scmp.ne.s32.totalorder %s69, %s70
      %p82 = scmp.eq.s32.totalorder %s18, 1
      %p83 = por %p81, %p82
      %p85 = scmp.ne.s32.totalorder %s70, %s84
      %p86 = scmp.eq.s32.totalorder %s18, 0
      %p87 = por %p85, %p86
      %s88 = ssub.s32 %s12, %s19
      %p89 = scmp.eq.s32.totalorder %s88, 0
      %s91 = sadd.s32 %s90, 1
      %s92 = scalar_select %p89, %s90, %s91
      %p95 = pneg %p89
      %p96 = scmp.eq.s32.totalorder %s12, 1
      %p97 = por %p95, %p96
      %p98 = scmp.ne.s32.totalorder %s90, %s93
      %p99 = scmp.eq.s32.totalorder %s12, 0
      %p100 = por %p98, %p99
      %p101 = scmp.ne.s32.totalorder %s90, %s93
      %p102 = scmp.eq.s32.totalorder %s17, 1
      %p103 = por %p101, %p102
      %p104 = scmp.ne.s32.totalorder %s93, %s94
      %p105 = scmp.eq.s32.totalorder %s17, 0
      %p106 = por %p104, %p105
      %p107 = scmp.ne.s32.totalorder %s93, %s94
      %p108 = scmp.eq.s32.totalorder %s18, 1
      %p109 = por %p107, %p108
      %p111 = scmp.ne.s32.totalorder %s94, %s110
      %p112 = scmp.eq.s32.totalorder %s18, 0
      %p113 = por %p111, %p112
      %p114 = scmp.le.s32.totalorder 1, %s12
      %p115 = scmp.lt.s32.totalorder %s12, 3
      %p116 = pnand %p114, %p115
      %p117 = pneg %p116
      // Predicated region
      $region9: #{patch_embed_forward.1} parent=5 // pred_check
        _
      $region10: #{patch_embed_forward.1} parent=5 // pred_check_branch
        %119 = sbr.rel (%p116) target = $region12
      $region11: #{patch_embed_forward.1} parent=5 // pred_region
        %s120 = ssub.s32 %s12, 1
        // Predicated region
        $region13: #{patch_embed_forward.1} parent=11 // pred_check
          %p121 = pneg %p59
        $region14: #{patch_embed_forward.1} parent=11 // pred_check_branch
          %123 = sbr.rel (%p121) target = $region16
        $region15: #{patch_embed_forward.1} parent=11 // pred_region
          _
        $region16: #{patch_embed_forward.1} parent=11 // pred_fallthru
          _
        // Predicated region
        $region17: #{patch_embed_forward.1} parent=11 // pred_check
          %p124 = pneg %p80
        $region18: #{patch_embed_forward.1} parent=11 // pred_check_branch
          %126 = sbr.rel (%p124) target = $region20
        $region19: #{patch_embed_forward.1} parent=11 // pred_region
          _
        $region20: #{patch_embed_forward.1} parent=11 // pred_fallthru
          _
      $region12: #{patch_embed_forward.1} parent=5 // pred_fallthru
        _
      %p127 = scmp.lt.s32.totalorder %s12, 2
      // Predicated region
      $region21: #{patch_embed_forward.1} parent=5 // pred_check
        %p128 = pneg %p127
      $region22: #{patch_embed_forward.1} parent=5 // pred_check_branch
        %130 = sbr.rel (%p128) target = $region24
      $region23: #{patch_embed_forward.1} parent=5 // pred_region
        // Predicated region
        $region25: #{patch_embed_forward.1} parent=23 // pred_check
          %p131 = pneg %p32
        $region26: #{patch_embed_forward.1} parent=23 // pred_check_branch
          %133 = sbr.rel (%p131) target = $region28
        $region27: #{patch_embed_forward.1} parent=23 // pred_region
          %s134 = smul.u32 32, %s12
          %p135 = scmp.lt.s32.totalorder %s134, 63
          %s136 = scalar_select %p135, %s134, 63
          %s137 = smul.addr %s136, 4
          %s138 = scalar_lea.vmem %s0, %s137
          %s139 = smul.u32 32, %s12
        $region28: #{patch_embed_forward.1} parent=23 // pred_fallthru
          _
      $region24: #{patch_embed_forward.1} parent=5 // pred_fallthru
        _
      %p140 = scmp.le.s32.totalorder 1, %s12
      %p141 = scmp.lt.s32.totalorder %s12, 3
      %p142 = pnand %p140, %p141
      %p143 = pneg %p142
      // Predicated region
      $region29: #{patch_embed_forward.1} parent=5 // pred_check
        _
      $region30: #{patch_embed_forward.1} parent=5 // pred_check_branch
        %145 = sbr.rel (%p142) target = $region32
      $region31: #{patch_embed_forward.1} parent=5 // pred_region
        %s146 = ssub.s32 %s12, 1
        %s147 = smul.u32 32, %s17
        %p148 = scmp.lt.s32.totalorder %s147, 63
        %s149 = scalar_select %p148, %s147, 63
        %s150 = smul.addr %s149, 4
        %s151 = scalar_lea.vmem %s0, %s150
        %p152 = pneg %p38
        %p153 = pneg %p35
        %p154 = pneg %p59
        %p155 = pneg %p56
        %p156 = pneg %p80
        %p157 = pneg %p77
        %p158 = pneg %p106
        %p159 = pneg %p103
        %s160 = sand.u32 %s93, 1
        %s161 = scalar_lea.sflag [#allocation3], %s160
        %s162 = sand.u32 %s93, 1
        %s163 = smul.addr %s162, 256
        %s164 = scalar_lea.vmem [#allocation2], %s163
        %s165 = smul.u32 32, %s17
        %p166 = scmp.lt.s32.totalorder %s165, 63
        %s167 = scalar_select %p166, %s165, 63
        %s168 = smul.addr %s167, 4
        %s169 = scalar_lea.vmem %s0, %s168
        %s170 = smul.u32 32, %s17
        %s171 = smul.u32 32, %s17
        %v173 = vld [vmem:[%s169] sm:$0xf]
        %v174 = vld [vmem:[%s169 + $0x4] sm:$0xf]
        %v175 = vld [vmem:[%s169 + $0x8] sm:$0xf]
        %v176 = vld [vmem:[%s169 + $0xc] sm:$0xf]
        %v177 = vld [vmem:[%s169 + $0x10] sm:$0xf]
        %v178 = vld [vmem:[%s169 + $0x14] sm:$0xf]
        %v179 = vld [vmem:[%s169 + $0x18] sm:$0xf]
        %v180 = vld [vmem:[%s169 + $0x1c] sm:$0xf]
        %v181 = vld [vmem:[%s169 + $0x20] sm:$0xf]
        %v182 = vld [vmem:[%s169 + $0x24] sm:$0xf]
        %v183 = vld [vmem:[%s169 + $0x28] sm:$0xf]
        %v184 = vld [vmem:[%s169 + $0x2c] sm:$0xf]
        %v185 = vld [vmem:[%s169 + $0x30] sm:$0xf]
        %v186 = vld [vmem:[%s169 + $0x34] sm:$0xf]
        %v187 = vld [vmem:[%s169 + $0x38] sm:$0xf]
        %v188 = vld [vmem:[%s169 + $0x3c] sm:$0xf]
        %v189 = vld [vmem:[%s169 + $0x40] sm:$0xf]
        %v190 = vld [vmem:[%s169 + $0x44] sm:$0xf]
        %v191 = vld [vmem:[%s169 + $0x48] sm:$0xf]
        %v192 = vld [vmem:[%s169 + $0x4c] sm:$0xf]
        %v193 = vld [vmem:[%s169 + $0x50] sm:$0xf]
        %v194 = vld [vmem:[%s169 + $0x54] sm:$0xf]
        %v195 = vld [vmem:[%s169 + $0x58] sm:$0xf]
        %v196 = vld [vmem:[%s169 + $0x5c] sm:$0xf]
        %v197 = vld [vmem:[%s169 + $0x60] sm:$0xf]
        %v198 = vld [vmem:[%s169 + $0x64] sm:$0xf]
        %v199 = vld [vmem:[%s169 + $0x68] sm:$0xf]
        %v200 = vld [vmem:[%s169 + $0x6c] sm:$0xf]
        %v201 = vld [vmem:[%s169 + $0x70] sm:$0xf]
        %v202 = vld [vmem:[%s169 + $0x74] sm:$0xf]
        %v203 = vld [vmem:[%s169 + $0x78] sm:$0xf]
        %v204 = vld [vmem:[%s169 + $0x7c] sm:$0xf]
        %v205 = vld [vmem:[%s1] sm:$0xf]
        %v206 = vld [vmem:[%s1 + $0x4] sm:$0xf]
        %v207 = vld [vmem:[%s1 + $0x8] sm:$0xf]
        %v208 = vld [vmem:[%s1 + $0xc] sm:$0xf]
        %v209 = vld [vmem:[%s1 + $0x10] sm:$0xf]
        %v210 = vld [vmem:[%s1 + $0x14] sm:$0xf]
        %v211 = vld [vmem:[%s2] sm:$0x1]
        %v213 = vlaneseq
        %v214 = vshrl.u32 %v213, 7
        %v215 = vsub.s32 0, %v214
        %v216 = vrot.slane %v211, %v215
        %v250 = vunpack.c.l.b16 %v173
        %v251 = vunpack.c.l.b16 %v174
        %v252 = vunpack.c.l.b16 %v175
        %v253 = vunpack.c.l.b16 %v176
        %v254 = vunpack.c.l.b16 %v177
        %v255 = vunpack.c.l.b16 %v178
        %v256 = vunpack.c.l.b16 %v179
        %v257 = vunpack.c.l.b16 %v180
        %v258 = vunpack.c.l.b16 %v181
        %v259 = vunpack.c.l.b16 %v182
        %v260 = vunpack.c.l.b16 %v183
        %v261 = vunpack.c.l.b16 %v184
        %v262 = vunpack.c.l.b16 %v185
        %v263 = vunpack.c.l.b16 %v186
        %v264 = vunpack.c.l.b16 %v187
        %v265 = vunpack.c.l.b16 %v188
        %v266 = vunpack.c.l.b16 %v189
        %v267 = vunpack.c.l.b16 %v190
        %v268 = vunpack.c.l.b16 %v191
        %v269 = vunpack.c.l.b16 %v192
        %v270 = vunpack.c.l.b16 %v193
        %v271 = vunpack.c.l.b16 %v194
        %v272 = vunpack.c.l.b16 %v195
        %v273 = vunpack.c.l.b16 %v196
        %v274 = vunpack.c.l.b16 %v197
        %v275 = vunpack.c.l.b16 %v198
        %v276 = vunpack.c.l.b16 %v199
        %v277 = vunpack.c.l.b16 %v200
        %v278 = vunpack.c.l.b16 %v201
        %v279 = vunpack.c.l.b16 %v202
        %v280 = vunpack.c.l.b16 %v203
        %v281 = vunpack.c.l.b16 %v204
        %v282 = vpack.c.b16 %v251, %v250
        %v283 = vpack.c.b16 %v253, %v252
        %v284 = vpack.c.b16 %v255, %v254
        %v285 = vpack.c.b16 %v257, %v256
        %v286 = vpack.c.b16 %v259, %v258
        %v287 = vpack.c.b16 %v261, %v260
        %v288 = vpack.c.b16 %v263, %v262
        %v289 = vpack.c.b16 %v265, %v264
        %v290 = vpack.c.b16 %v267, %v266
        %v291 = vpack.c.b16 %v269, %v268
        %v292 = vpack.c.b16 %v271, %v270
        %v293 = vpack.c.b16 %v273, %v272
        %v294 = vpack.c.b16 %v275, %v274
        %v295 = vpack.c.b16 %v277, %v276
        %v296 = vpack.c.b16 %v279, %v278
        %v297 = vpack.c.b16 %v281, %v280
        %v304 = vunpack.c.l.b16 %v205
        %v305 = vunpack.c.l.b16 %v206
        %v306 = vunpack.c.l.b16 %v207
        %v307 = vunpack.c.l.b16 %v208
        %v308 = vunpack.c.l.b16 %v209
        %v309 = vunpack.c.l.b16 %v210
        %v310 = vpack.c.b16 %v305, %v304
        %v311 = vpack.c.b16 %v307, %v306
        %v312 = vpack.c.b16 %v309, %v308
        %vm316 = vcmask 392192
        %v318 = vsel %vm316, %v282, 0
        %v321 = vsel %vm316, %v283, 0
        %v324 = vsel %vm316, %v284, 0
        %v327 = vsel %vm316, %v285, 0
        %v330 = vsel %vm316, %v286, 0
        %v333 = vsel %vm316, %v287, 0
        %v336 = vsel %vm316, %v288, 0
        %v339 = vsel %vm316, %v289, 0
        %v342 = vsel %vm316, %v290, 0
        %v345 = vsel %vm316, %v291, 0
        %v348 = vsel %vm316, %v292, 0
        %v351 = vsel %vm316, %v293, 0
        %v354 = vsel %vm316, %v294, 0
        %v357 = vsel %vm316, %v295, 0
        %v360 = vsel %vm316, %v296, 0
        %v363 = vsel %vm316, %v297, 0
        %365 = vmatprep.subr.bf16.mxu0 0
        %366 = vmatpush1.bf16.msra.mxu0 %v310
        %367 = vmatprep.subr.bf16.mxu0 0
        %368 = vmatpush1.bf16.msra.mxu0 %v311
        %369 = vmatprep.subr.bf16.mxu0 0
        %370 = vmatpush1.bf16.msra.mxu0 %v312
        %371 = vmatprep.subr.bf16.mxu0 0
        %372 = vmatpush1.bf16.msra.mxu0 0
        %373 = vmatprep.subr.bf16.mxu0 0
        %374 = vmatpush1.bf16.msra.mxu0 0
        %375 = vmatprep.subr.bf16.mxu0 0
        %376 = vmatpush1.bf16.msra.mxu0 0
        %377 = vmatprep.subr.bf16.mxu0 0
        %378 = vmatpush1.bf16.msra.mxu0 0
        %379 = vmatprep.subr.bf16.mxu0 0
        %380 = vmatpush1.bf16.msra.mxu0 0
        %381 = vmatprep.subr.bf16.mxu0 0
        %382 = vmatpush1.bf16.msra.mxu0 0
        %383 = vmatprep.subr.bf16.mxu0 0
        %384 = vmatpush1.bf16.msra.mxu0 0
        %385 = vmatprep.subr.bf16.mxu0 0
        %386 = vmatpush1.bf16.msra.mxu0 0
        %387 = vmatprep.subr.bf16.mxu0 0
        %388 = vmatpush1.bf16.msra.mxu0 0
        %389 = vmatprep.subr.bf16.mxu0 0
        %390 = vmatpush1.bf16.msra.mxu0 0
        %391 = vmatprep.subr.bf16.mxu0 0
        %392 = vmatpush1.bf16.msra.mxu0 0
        %393 = vmatprep.subr.bf16.mxu0 0
        %394 = vmatpush1.bf16.msra.mxu0 0
        %395 = vmatprep.subr.bf16.mxu0 0
        %396 = vmatpush1.bf16.msra.mxu0 0
        %397 = vmatprep.mubr.bf16.mxu0 0
        %398 = vmatmul.mubr.bf16.gmra.mrb[0].mxu0 %v318
        %v399 = vpop.f32.mrb[0].mxu0
        %v400 = vadd.f32 %v216, %v399
        %v401 = vpop.f32.mrb[0].mxu0
        %v402 = vpop.f32.mrb[0].mxu0
        %v403 = vadd.f32 %v216, %v402
        %v404 = vpop.f32.mrb[0].mxu0
        %405 = vmatprep.mubr.bf16.mxu0 0
        %406 = vmatmul.mubr.bf16.gmra.mrb[0].mxu0 %v321
        %v407 = vpop.f32.mrb[0].mxu0
        %v408 = vadd.f32 %v216, %v407
        %v409 = vpop.f32.mrb[0].mxu0
        %v410 = vpop.f32.mrb[0].mxu0
        %v411 = vadd.f32 %v216, %v410
        %v412 = vpop.f32.mrb[0].mxu0
        %413 = vmatprep.mubr.bf16.mxu0 0
        %414 = vmatmul.mubr.bf16.gmra.mrb[0].mxu0 %v324
        %v415 = vpop.f32.mrb[0].mxu0
        %v416 = vadd.f32 %v216, %v415
        %v417 = vpop.f32.mrb[0].mxu0
        %v418 = vpop.f32.mrb[0].mxu0
        %v419 = vadd.f32 %v216, %v418
        %v420 = vpop.f32.mrb[0].mxu0
        %421 = vmatprep.mubr.bf16.mxu0 0
        %422 = vmatmul.mubr.bf16.gmra.mrb[0].mxu0 %v327
        %v423 = vpop.f32.mrb[0].mxu0
        %v424 = vadd.f32 %v216, %v423
        %v425 = vpop.f32.mrb[0].mxu0
        %v426 = vpop.f32.mrb[0].mxu0
        %v427 = vadd.f32 %v216, %v426
        %v428 = vpop.f32.mrb[0].mxu0
        %429 = vmatprep.mubr.bf16.mxu0 0
        %430 = vmatmul.mubr.bf16.gmra.mrb[0].mxu0 %v330
        %v431 = vpop.f32.mrb[0].mxu0
        %v432 = vadd.f32 %v216, %v431
        %v433 = vpop.f32.mrb[0].mxu0
        %v434 = vpop.f32.mrb[0].mxu0
        %v435 = vadd.f32 %v216, %v434
        %v436 = vpop.f32.mrb[0].mxu0
        %437 = vmatprep.mubr.bf16.mxu0 0
        %438 = vmatmul.mubr.bf16.gmra.mrb[0].mxu0 %v333
        %v439 = vpop.f32.mrb[0].mxu0
        %v440 = vadd.f32 %v216, %v439
        %v441 = vpop.f32.mrb[0].mxu0
        %v442 = vpop.f32.mrb[0].mxu0
        %v443 = vadd.f32 %v216, %v442
        %v444 = vpop.f32.mrb[0].mxu0
        %445 = vmatprep.mubr.bf16.mxu0 0
        %446 = vmatmul.mubr.bf16.gmra.mrb[0].mxu0 %v336
        %v447 = vpop.f32.mrb[0].mxu0
        %v448 = vadd.f32 %v216, %v447
        %v449 = vpop.f32.mrb[0].mxu0
        %v450 = vpop.f32.mrb[0].mxu0
        %v451 = vadd.f32 %v216, %v450
        %v452 = vpop.f32.mrb[0].mxu0
        %453 = vmatprep.mubr.bf16.mxu0 0
        %454 = vmatmul.mubr.bf16.gmra.mrb[0].mxu0 %v339
        %v455 = vpop.f32.mrb[0].mxu0
        %v456 = vadd.f32 %v216, %v455
        %v457 = vpop.f32.mrb[0].mxu0
        %v458 = vpop.f32.mrb[0].mxu0
        %v459 = vadd.f32 %v216, %v458
        %v460 = vpop.f32.mrb[0].mxu0
        %461 = vmatprep.mubr.bf16.mxu0 0
        %462 = vmatmul.mubr.bf16.gmra.mrb[0].mxu0 %v342
        %v463 = vpop.f32.mrb[0].mxu0
        %v464 = vadd.f32 %v216, %v463
        %v465 = vpop.f32.mrb[0].mxu0
        %v466 = vpop.f32.mrb[0].mxu0
        %v467 = vadd.f32 %v216, %v466
        %v468 = vpop.f32.mrb[0].mxu0
        %469 = vmatprep.mubr.bf16.mxu0 0
        %470 = vmatmul.mubr.bf16.gmra.mrb[0].mxu0 %v345
        %v471 = vpop.f32.mrb[0].mxu0
        %v472 = vadd.f32 %v216, %v471
        %v473 = vpop.f32.mrb[0].mxu0
        %v474 = vpop.f32.mrb[0].mxu0
        %v475 = vadd.f32 %v216, %v474
        %v476 = vpop.f32.mrb[0].mxu0
        %477 = vmatprep.mubr.bf16.mxu0 0
        %478 = vmatmul.mubr.bf16.gmra.mrb[0].mxu0 %v348
        %v479 = vpop.f32.mrb[0].mxu0
        %v480 = vadd.f32 %v216, %v479
        %v481 = vpop.f32.mrb[0].mxu0
        %v482 = vpop.f32.mrb[0].mxu0
        %v483 = vadd.f32 %v216, %v482
        %v484 = vpop.f32.mrb[0].mxu0
        %485 = vmatprep.mubr.bf16.mxu0 0
        %486 = vmatmul.mubr.bf16.gmra.mrb[0].mxu0 %v351
        %v487 = vpop.f32.mrb[0].mxu0
        %v488 = vadd.f32 %v216, %v487
        %v489 = vpop.f32.mrb[0].mxu0
        %v490 = vpop.f32.mrb[0].mxu0
        %v491 = vadd.f32 %v216, %v490
        %v492 = vpop.f32.mrb[0].mxu0
        %493 = vmatprep.mubr.bf16.mxu0 0
        %494 = vmatmul.mubr.bf16.gmra.mrb[0].mxu0 %v354
        %v495 = vpop.f32.mrb[0].mxu0
        %v496 = vadd.f32 %v216, %v495
        %v497 = vpop.f32.mrb[0].mxu0
        %v498 = vpop.f32.mrb[0].mxu0
        %v499 = vadd.f32 %v216, %v498
        %v500 = vpop.f32.mrb[0].mxu0
        %501 = vmatprep.mubr.bf16.mxu0 0
        %502 = vmatmul.mubr.bf16.gmra.mrb[0].mxu0 %v357
        %v503 = vpop.f32.mrb[0].mxu0
        %v504 = vadd.f32 %v216, %v503
        %v505 = vpop.f32.mrb[0].mxu0
        %v506 = vpop.f32.mrb[0].mxu0
        %v507 = vadd.f32 %v216, %v506
        %v508 = vpop.f32.mrb[0].mxu0
        %509 = vmatprep.mubr.bf16.mxu0 0
        %510 = vmatmul.mubr.bf16.gmra.mrb[0].mxu0 %v360
        %v511 = vpop.f32.mrb[0].mxu0
        %v512 = vadd.f32 %v216, %v511
        %v513 = vpop.f32.mrb[0].mxu0
        %v514 = vpop.f32.mrb[0].mxu0
        %v515 = vadd.f32 %v216, %v514
        %v516 = vpop.f32.mrb[0].mxu0
        %517 = vmatprep.mubr.bf16.mxu0 0
        %518 = vmatmul.mubr.bf16.gmra.mrb[0].mxu0 %v363
        %v519 = vpop.f32.mrb[0].mxu0
        %v520 = vadd.f32 %v216, %v519
        %v521 = vpop.f32.mrb[0].mxu0
        %v522 = vpop.f32.mrb[0].mxu0
        %v523 = vadd.f32 %v216, %v522
        %v524 = vpop.f32.mrb[0].mxu0
        %525 = vdwg.mxu0
        %vm526 = vcmask 261120
        %527 = vst.msk [vmem:[%s164] sm:$0xff] %vm526, %v400
        %528 = vst.msk [vmem:[%s164 + $0x8] sm:$0xff] %vm526, %v403
        %529 = vst.msk [vmem:[%s164 + $0x10] sm:$0xff] %vm526, %v408
        %530 = vst.msk [vmem:[%s164 + $0x18] sm:$0xff] %vm526, %v411
        %531 = vst.msk [vmem:[%s164 + $0x20] sm:$0xff] %vm526, %v416
        %532 = vst.msk [vmem:[%s164 + $0x28] sm:$0xff] %vm526, %v419
        %533 = vst.msk [vmem:[%s164 + $0x30] sm:$0xff] %vm526, %v424
        %534 = vst.msk [vmem:[%s164 + $0x38] sm:$0xff] %vm526, %v427
        %535 = vst.msk [vmem:[%s164 + $0x40] sm:$0xff] %vm526, %v432
        %536 = vst.msk [vmem:[%s164 + $0x48] sm:$0xff] %vm526, %v435
        %537 = vst.msk [vmem:[%s164 + $0x50] sm:$0xff] %vm526, %v440
        %538 = vst.msk [vmem:[%s164 + $0x58] sm:$0xff] %vm526, %v443
        %539 = vst.msk [vmem:[%s164 + $0x60] sm:$0xff] %vm526, %v448
        %540 = vst.msk [vmem:[%s164 + $0x68] sm:$0xff] %vm526, %v451
        %541 = vst.msk [vmem:[%s164 + $0x70] sm:$0xff] %vm526, %v456
        %542 = vst.msk [vmem:[%s164 + $0x78] sm:$0xff] %vm526, %v459
        %543 = vst.msk [vmem:[%s164 + $0x80] sm:$0xff] %vm526, %v464
        %544 = vst.msk [vmem:[%s164 + $0x88] sm:$0xff] %vm526, %v467
        %545 = vst.msk [vmem:[%s164 + $0x90] sm:$0xff] %vm526, %v472
        %546 = vst.msk [vmem:[%s164 + $0x98] sm:$0xff] %vm526, %v475
        %547 = vst.msk [vmem:[%s164 + $0xa0] sm:$0xff] %vm526, %v480
        %548 = vst.msk [vmem:[%s164 + $0xa8] sm:$0xff] %vm526, %v483
        %549 = vst.msk [vmem:[%s164 + $0xb0] sm:$0xff] %vm526, %v488
        %550 = vst.msk [vmem:[%s164 + $0xb8] sm:$0xff] %vm526, %v491
        %551 = vst.msk [vmem:[%s164 + $0xc0] sm:$0xff] %vm526, %v496
        %552 = vst.msk [vmem:[%s164 + $0xc8] sm:$0xff] %vm526, %v499
        %553 = vst.msk [vmem:[%s164 + $0xd0] sm:$0xff] %vm526, %v504
        %554 = vst.msk [vmem:[%s164 + $0xd8] sm:$0xff] %vm526, %v507
        %555 = vst.msk [vmem:[%s164 + $0xe0] sm:$0xff] %vm526, %v512
        %556 = vst.msk [vmem:[%s164 + $0xe8] sm:$0xff] %vm526, %v515
        %557 = vst.msk [vmem:[%s164 + $0xf0] sm:$0xff] %vm526, %v520
        %558 = vst.msk [vmem:[%s164 + $0xf8] sm:$0xff] %vm526, %v523
        %s559 = sand.u32 %s93, 1
        %s560 = scalar_lea.sflag [#allocation3], %s559
        %s561 = sand.u32 %s93, 1
        %s562 = smul.addr %s561, 256
        %s563 = scalar_lea.vmem [#allocation2], %s562
        // Predicated region
        $region33: #{patch_embed_forward.1} parent=31 // pred_check
          %p564 = pneg %p103
        $region34: #{patch_embed_forward.1} parent=31 // pred_check_branch
          %566 = sbr.rel (%p564) target = $region36
        $region35: #{patch_embed_forward.1} parent=31 // pred_region
          %s567 = smul.u32 32, %s17
          %s569 = ssub.s32 4096, 4096
          %570 = vsyncadd %s560, %s569
          %s571 = smul.addr %s567, 128
          %s572 = scalar_lea.hbm %s3, %s571
          %s573 = sshll.u32 %s563, 4
          %s574 = int_to_ptr.vmem [resolvable:$true] %s573
          %579 = dma.vmem_to_hbm [thread:$0]  %s574, 4096, %s572, %s560, 128, 128, 8
        $region36: #{patch_embed_forward.1} parent=31 // pred_fallthru
          _
      $region32: #{patch_embed_forward.1} parent=5 // pred_fallthru
        _
      %p580 = scmp.le.s32.totalorder 2, %s12
      // Predicated region
      $region37: #{patch_embed_forward.1} parent=5 // pred_check
        %p581 = pneg %p580
      $region38: #{patch_embed_forward.1} parent=5 // pred_check_branch
        %583 = sbr.rel (%p581) target = $region40
      $region39: #{patch_embed_forward.1} parent=5 // pred_region
        %s584 = ssub.s32 %s12, 2
        // Predicated region
        $region41: #{patch_embed_forward.1} parent=39 // pred_check
          %p585 = pneg %p109
        $region42: #{patch_embed_forward.1} parent=39 // pred_check_branch
          %587 = sbr.rel (%p585) target = $region44
        $region43: #{patch_embed_forward.1} parent=39 // pred_region
          %s588 = sand.u32 %s94, 1
          %s589 = scalar_lea.sflag [#allocation3], %s588
          %s590 = sand.u32 %s94, 1
          %s591 = smul.addr %s590, 256
          %s592 = scalar_lea.vmem [#allocation2], %s591
          %593 = dma.done %s589, 4096
        $region44: #{patch_embed_forward.1} parent=39 // pred_fallthru
          _
      $region40: #{patch_embed_forward.1} parent=5 // pred_fallthru
        _
    $region6: #{patch_embed_forward.1} parent=1 // loop_footer
      %s16 = sadd.s32 1, %s12
    $region7: #{patch_embed_forward.1} parent=1 // loop_footer_branch
      %11 = sbr.rel target = $region3
    $region8: #{patch_embed_forward.1} parent=1 // loop_exit
      _
    %594 = vsyncpa [#allocation3], 1
    %s595 = scalar_lea.sflag [#allocation3], 1
    %596 = vsyncpa %s595, 1

</llo_original>
